<compile_context>
chip_gen: v7x
topology: tpu7x:2x2x1
jax: 0.10.0
libtpu: 0.0.40
codegen_flags: <defaults>
</compile_context>

<pallas_src>
import math
from functools import partial

import jax
import jax.numpy as jnp
from jax import lax
from jax.experimental import pallas as pl
from jax.experimental.pallas import tpu as pltpu

NEG_MIN = float(jnp.finfo(jnp.float32).min)


# ----------------------------------------------------------------------------
# Tiled, pipelined matmul kernel (projections)
# ----------------------------------------------------------------------------
def _matmul_kernel(x_ref, w_ref, o_ref, acc_ref):
    @pl.when(pl.program_id(2) == 0)
    def _():
        acc_ref[...] = jnp.zeros_like(acc_ref)

    acc_ref[...] += jnp.dot(x_ref[...], w_ref[...],
                            preferred_element_type=jnp.float32)

    @pl.when(pl.program_id(2) == pl.num_programs(2) - 1)
    def _():
        o_ref[...] = acc_ref[...].astype(o_ref.dtype)


def _pick_tile(dim, pref):
    """Largest tile <= pref that divides dim (halving search)."""
    if dim <= pref:
        return dim
    t = pref
    while dim % t:
        t //= 2
    return max(t, 1)


def linear(x, w_t, *, out_dtype=jnp.bfloat16, tm=256, tn=256, tk=512):
    """x: (M, K) bf16, w_t: (K, N) bf16 (pre-transposed weight) -> (M, N) out_dtype."""
    M, K = x.shape
    _, N = w_t.shape
    tm, tn, tk = _pick_tile(M, tm), _pick_tile(N, tn), _pick_tile(K, tk)
    return pl.pallas_call(
        _matmul_kernel,
        out_shape=jax.ShapeDtypeStruct((M, N), out_dtype),
        grid=(M // tm, N // tn, K // tk),
        in_specs=[
            pl.BlockSpec((tm, tk), lambda i, j, k: (i, k)),
            pl.BlockSpec((tk, tn), lambda i, j, k: (k, j)),
        ],
        out_specs=pl.BlockSpec((tm, tn), lambda i, j, k: (i, j)),
        scratch_shapes=[pltpu.VMEM((tm, tn), jnp.float32)],
        compiler_params=pltpu.CompilerParams(
            dimension_semantics=("parallel", "parallel", "arbitrary")),
    )(x, w_t)


# ----------------------------------------------------------------------------
# H2O sparse attention kernel: one (batch, head) per grid step, query-tiled.
# ----------------------------------------------------------------------------
def _h2o_attn_kernel(q_ref, k_ref, v_ref, cos_ref, sin_ref, o_ref,
                     q_scr, k_scr, cs_scr, heavy_scr, *,
                     heavy_budget, recent_budget, scale, q_tile, key_tile):
    S, D = q_ref.shape
    nq = S // q_tile
    nk = S // key_tile
    half = D // 2

    cos = cos_ref[...]            # (S, D) f32
    sin = sin_ref[...]            # (S, D) f32, first half already negated (sign-folded)

    # ---- fused RoPE (rotate_half == roll by D/2 with the sign folded into sin) ----
    # Q: per head; fold 1/sqrt(D) in here (S*D multiplies, never S*S).
    qf = q_ref[...].astype(jnp.float32)
    q_scr[...] = ((qf * cos + pltpu.roll(qf, half, axis=1) * sin) * scale
                  ).astype(q_scr.dtype)

    # K: once per KV group -- the K block index is independent of g, so it stays resident
    # and the rotated copy in k_scr is still valid for g > 0.
    @pl.when(pl.program_id(2) == 0)
    def _():
        kf = k_ref[...].astype(jnp.float32)
        k_scr[...] = (kf * cos + pltpu.roll(kf, half, axis=1) * sin
                      ).astype(k_scr.dtype)

    # ---- pass 1: accumulate per-key col_score over query tiles (VMEM O(Tq*S)) ----
    cs_scr[...] = jnp.zeros_like(cs_scr)
    ones_q = jnp.ones((1, q_tile), jnp.float32)   # hoisted (no re-broadcast per iter)

    @pl.loop(0, nq)
    def _(t):
        start = pl.multiple_of(t * q_tile, q_tile)
        qs = q_scr[pl.ds(start, q_tile), :]                                  # (Tq, D) bf16
        s = lax.dot_general(qs, k_scr[...], (((1,), (1,)), ((), ())),
                            preferred_element_type=jnp.float32)             # (Tq, S)
        qi = start + lax.broadcasted_iota(jnp.int32, (q_tile, S), 0)
        kj = lax.broadcasted_iota(jnp.int32, (q_tile, S), 1)
        s = jnp.where(kj <= qi, s, NEG_MIN)                                  # causal
        e = jnp.exp(s - jnp.max(s, axis=-1, keepdims=True))
        # Exact reciprocal: col_score feeds a hard top-k selection.
        inv = pl.reciprocal(jnp.sum(e, axis=-1, keepdims=True), approx=False)
        probs = e * inv                                                      # (Tq, S) f32
        # Column-sum on the MXU (f32) instead of a cross-sublane XLU reduction.
        cs_scr[...] += jnp.dot(ones_q, probs, preferred_element_type=jnp.float32)

    # ---- heavy-hitter selection: rank(col_score) < heavy_budget (top-k with stable
    #      lower-index tie-break, matching torch.topk / lax.top_k selection) ----
    cs_col = cs_scr[...].T                         # (S, 1): O(S) relayout, no (S,S) transpose
    ones_s = jnp.ones((1, S), jnp.bfloat16)

    @pl.loop(0, nk)
    def _(j):
        start = pl.multiple_of(j * key_tile, key_tile)
        cs_tile = cs_scr[:, pl.ds(start, key_tile)]                          # (1, Tk)
        m_idx = lax.broadcasted_iota(jnp.int32, (S, key_tile), 0)
        j_idx = start + lax.broadcasted_iota(jnp.int32, (S, key_tile), 1)
        beats = (cs_col > cs_tile) | ((cs_col == cs_tile) & (m_idx < j_idx))  # (S, Tk)
        # Count on the MXU: 0/1 values are exact in bf16, accumulation in f32.
        rank = jnp.dot(ones_s, beats.astype(jnp.bfloat16),
                       preferred_element_type=jnp.float32)                   # (1, Tk)
        heavy_scr[:, pl.ds(start, key_tile)] = (rank < heavy_budget).astype(jnp.float32)

    heavy_row = heavy_scr[...] > 0.5                                         # (1, S) bool

    # ---- pass 2: masked attention, streamed by query tile (single exp pass reused:
    #      second softmax via shift-invariance on the causal-max-shifted e) ----
    @pl.loop(0, nq)
    def _(t):
        start = pl.multiple_of(t * q_tile, q_tile)
        qs = q_scr[pl.ds(start, q_tile), :]
        s = lax.dot_general(qs, k_scr[...], (((1,), (1,)), ((), ())),
                            preferred_element_type=jnp.float32)              # (Tq, S)
        qi = start + lax.broadcasted_iota(jnp.int32, (q_tile, S), 0)
        kj = lax.broadcasted_iota(jnp.int32, (q_tile, S), 1)
        s = jnp.where(kj <= qi, s, NEG_MIN)
        e = jnp.exp(s - jnp.max(s, axis=-1, keepdims=True))
        # "recent" band exactly as in the reference module:
        # triu(ones, diag=recent_budget) & tril(ones, diag=-recent_budget)
        d = kj - qi
        band = (d >= recent_budget) & (d <= -recent_budget)
        keep = heavy_row | band
        ek = jnp.where(keep, e, 0.0)
        denom = jnp.sum(ek, axis=-1, keepdims=True)
        # Degenerate rows (nothing kept) -> uniform 1/S, matching the all-fp-min-row
        # behavior of the reference second softmax.
        p = jnp.where(denom > 0.0,
                      ek * pl.reciprocal(denom, approx=True),
                      jnp.float32(1.0 / S))
        out = jnp.dot(p.astype(jnp.bfloat16), v_ref[...],
                      preferred_element_type=jnp.float32)                    # (Tq, D)
        # TODO(synk): attention_dropout not modeled (p=0.0 / eval mode in the module).
        o_ref[pl.ds(start, q_tile), :] = out.astype(o_ref.dtype)


def _attention_vmem_limit():
    # Review: <= ~48 MiB on v7x (64 MiB physical / TC), ~96 MiB on v5e/v6e (128 MiB).
    cap = 64 * 1024 * 1024
    try:
        info = pltpu.get_tpu_info()
        cap = int(getattr(info, "vmem_capacity_bytes", cap)) or cap
    except Exception:
        pass
    return min((cap * 3) // 4, 100 * 1024 * 1024)


def h2o_attention(q, k, v, cos, sin_rot, heavy_budget, recent_budget, *,
                  q_tile=256, key_tile=512):
    """q: (B,H,S,D) bf16; k,v: (B,KVH,S,D) bf16; cos/sin_rot: (S,D) f32 -> (B,H,S,D) bf16."""
    B, H, S, D = q.shape
    KVH = k.shape[1]
    G = H // KVH
    q_tile = _pick_tile(S, q_tile)
    key_tile = _pick_tile(S, key_tile)
    kernel = partial(_h2o_attn_kernel,
                     heavy_budget=heavy_budget,
                     recent_budget=recent_budget,
                     scale=1.0 / math.sqrt(D),
                     q_tile=q_tile,
                     key_tile=key_tile)
    return pl.pallas_call(
        kernel,
        out_shape=jax.ShapeDtypeStruct((B, H, S, D), jnp.bfloat16),
        grid=(B, KVH, G),
        in_specs=[
            pl.BlockSpec((None, None, S, D), lambda b, kv, g: (b, kv * G + g, 0, 0)),
            # K/V block index independent of g -> VMEM-resident across the G query heads
            # of one kv head (implicit repeat_kv, no re-DMA).
            pl.BlockSpec((None, None, S, D), lambda b, kv, g: (b, kv, 0, 0)),
            pl.BlockSpec((None, None, S, D), lambda b, kv, g: (b, kv, 0, 0)),
            pl.BlockSpec((S, D), lambda b, kv, g: (0, 0)),
            pl.BlockSpec((S, D), lambda b, kv, g: (0, 0)),
        ],
        out_specs=pl.BlockSpec((None, None, S, D), lambda b, kv, g: (b, kv * G + g, 0, 0)),
        scratch_shapes=[
            pltpu.VMEM((S, D), jnp.bfloat16),   # rope'd + scaled Q
            pltpu.VMEM((S, D), jnp.bfloat16),   # rope'd K (cached across the KV group)
            pltpu.VMEM((1, S), jnp.float32),    # accumulated col_score
            pltpu.VMEM((1, S), jnp.float32),    # heavy-hitter mask (0/1)
        ],
        compiler_params=pltpu.CompilerParams(
            dimension_semantics=("parallel", "parallel", "arbitrary"),
            vmem_limit_bytes=_attention_vmem_limit()),
    )(q, k, v, cos, sin_rot)


# ----------------------------------------------------------------------------
# RoPE tables (parameter-derived, built once outside the kernels)
# ----------------------------------------------------------------------------
def rope_cos_sin(S, D, theta):
    inv_freq = 1.0 / (theta ** (jnp.arange(0, D, 2, dtype=jnp.float32) / D))
    pos = jnp.arange(S, dtype=jnp.float32)
    freqs = jnp.outer(pos, inv_freq)                  # (S, D/2)
    emb = jnp.concatenate([freqs, freqs], axis=-1)    # (S, D)
    return jnp.cos(emb), jnp.sin(emb)


def _rotate_half(x):
    x1, x2 = jnp.split(x, 2, axis=-1)
    return jnp.concatenate([-x2, x1], axis=-1)


# ----------------------------------------------------------------------------
# Parameter prep (done ONCE outside the forward: no per-call concat/transpose copy)
# ----------------------------------------------------------------------------
def prepare_params(params):
    wqkv_t = jnp.concatenate(
        [params["wq"], params["wk"], params["wv"]], axis=0).T.astype(jnp.bfloat16)
    wo_t = params["wo"].T.astype(jnp.bfloat16)
    return {"wqkv_t": wqkv_t, "wo_t": wo_t}


# ----------------------------------------------------------------------------
# Full forward (Pallas path)
# ----------------------------------------------------------------------------
def sparse_llama_attention(hidden_states, prepped, *, num_heads, num_kv_heads,
                           head_dim, rope_theta,
                           heavy_ratio=0.6, recent_ratio=0.6, q_tile=256):
    B, S, hidden = hidden_states.shape
    H, KVH, D = num_heads, num_kv_heads, head_dim

    x2d = hidden_states.reshape(B * S, hidden).astype(jnp.bfloat16)

    # Fused Q|K|V projection: activations read once, bf16 output (half the writeback).
    qkv = linear(x2d, prepped["wqkv_t"], out_dtype=jnp.bfloat16)   # (B*S, (H+2*KVH)*D)
    q = qkv[:, :H * D].reshape(B, S, H, D).transpose(0, 2, 1, 3)
    k = qkv[:, H * D:(H + KVH) * D].reshape(B, S, KVH, D).transpose(0, 2, 1, 3)
    v = qkv[:, (H + KVH) * D:].reshape(B, S, KVH, D).transpose(0, 2, 1, 3)
    # TODO(synk): reading Q/K/V straight from the (B*S, nheads*D) projection layout would
    # drop this transpose copy, but a per-head column block violates the (8,128) BlockSpec
    # rule for small head_dim, so the (B,H,S,D) layout is kept.

    cos, sin = rope_cos_sin(S, D, rope_theta)
    # Sign-folded sin so the in-kernel rotate_half is a single pltpu.roll.
    sin_rot = jnp.concatenate([-sin[:, :D // 2], sin[:, D // 2:]], axis=-1)

    heavy_budget = int(heavy_ratio * S)
    recent_budget = int(recent_ratio * S)

    attn = h2o_attention(q, k, v, cos, sin_rot, heavy_budget, recent_budget,
                         q_tile=q_tile)                            # (B, H, S, D) bf16
    attn2d = attn.transpose(0, 2, 1, 3).reshape(B * S, H * D)
    out = linear(attn2d, prepped["wo_t"], out_dtype=jnp.float32).reshape(B, S, hidden)
    return out


# ----------------------------------------------------------------------------
# Pure-JAX reference (mirrors the PyTorch forward and the kernel's dtype path)
# ----------------------------------------------------------------------------
def reference_forward(hidden_states, params, *, num_heads, num_kv_heads,
                      head_dim, rope_theta, heavy_ratio=0.6, recent_ratio=0.6):
    B, S, hidden = hidden_states.shape
    H, KVH, D = num_heads, num_kv_heads, head_dim
    G = H // KVH
    x2d = hidden_states.reshape(B * S, hidden).astype(jnp.bfloat16)

    def proj(w):
        return jnp.dot(x2d, w.T.astype(jnp.bfloat16),
                       preferred_element_type=jnp.float32).astype(jnp.bfloat16)

    q = proj(params["wq"]).reshape(B, S, H, D).transpose(0, 2, 1, 3)
    k = proj(params["wk"]).reshape(B, S, KVH, D).transpose(0, 2, 1, 3)
    v = proj(params["wv"]).reshape(B, S, KVH, D).transpose(0, 2, 1, 3)

    cos, sin = rope_cos_sin(S, D, rope_theta)
    cos4, sin4 = cos[None, None], sin[None, None]
    scale = 1.0 / math.sqrt(D)
    qf, kf = q.astype(jnp.float32), k.astype(jnp.float32)
    q_r = ((qf * cos4 + _rotate_half(qf) * sin4) * scale).astype(jnp.bfloat16)
    k_r = (kf * cos4 + _rotate_half(kf) * sin4).astype(jnp.bfloat16)

    k_rep = jnp.repeat(k_r, G, axis=1)   # repeat_kv
    v_rep = jnp.repeat(v, G, axis=1)

    s = jnp.einsum('bhqd,bhkd->bhqk', q_r, k_rep,
                   preferred_element_type=jnp.float32)
    causal = jnp.tril(jnp.ones((S, S), dtype=bool))
    s = jnp.where(causal[None, None], s, NEG_MIN)

    heavy_budget = int(heavy_ratio * S)
    recent_budget = int(recent_ratio * S)

    tmp = jax.nn.softmax(s, axis=-1)
    tmp_sum = tmp.sum(axis=-2)                                   # (B, H, S)
    _, topk = lax.top_k(tmp_sum, heavy_budget)
    heavy = jnp.sum(jax.nn.one_hot(topk, S, dtype=jnp.int32), axis=-2) > 0
    heavy = heavy[:, :, None, :]

    qi = jnp.arange(S)[:, None]
    kj = jnp.arange(S)[None, :]
    band = ((kj - qi) >= recent_budget) & ((kj - qi) <= -recent_budget)
    keep = heavy | band[None, None]

    s2 = jnp.where(keep, s, NEG_MIN)
    p = jax.nn.softmax(s2, axis=-1)
    out = jnp.einsum('bhqk,bhkd->bhqd', p.astype(jnp.bfloat16), v_rep,
                     preferred_element_type=jnp.float32)
    out = out.astype(jnp.bfloat16).transpose(0, 2, 1, 3).reshape(B * S, H * D)
    return jnp.dot(out, params["wo"].T.astype(jnp.bfloat16),
                   preferred_element_type=jnp.float32).reshape(B, S, hidden)


# ----------------------------------------------------------------------------
if __name__ == "__main__":
    # small config (GQA: 2 heads / 1 kv head, llama-style head_dim=128)
    B, S = 2, 8
    hidden_size = 256
    num_heads = 2
    num_kv_heads = 1
    head_dim = hidden_size // num_heads      # 128
    rope_theta = 10000.0

    key = jax.random.PRNGKey(0)
    k0, k1, k2, k3, k4 = jax.random.split(key, 5)
    params = {
        "wq": 0.05 * jax.random.normal(k0, (num_heads * head_dim, hidden_size), jnp.float32),
        "wk": 0.05 * jax.random.normal(k1, (num_kv_heads * head_dim, hidden_size), jnp.float32),
        "wv": 0.05 * jax.random.normal(k2, (num_kv_heads * head_dim, hidden_size), jnp.float32),
        "wo": 0.05 * jax.random.normal(k3, (hidden_size, num_heads * head_dim), jnp.float32),
    }
    hidden_states = jax.random.normal(k4, (B, S, hidden_size), jnp.float32)

    prepped = prepare_params(params)   # once, outside the forward

    out = sparse_llama_attention(
        hidden_states, prepped,
        num_heads=num_heads, num_kv_heads=num_kv_heads,
        head_dim=head_dim, rope_theta=rope_theta)
    out = jax.block_until_ready(out)

    ref = reference_forward(
        hidden_states, params,
        num_heads=num_heads, num_kv_heads=num_kv_heads,
        head_dim=head_dim, rope_theta=rope_theta)
    ref = jax.block_until_ready(ref)

    assert out.shape == (B, S, hidden_size)
    assert jnp.allclose(out, ref, atol=2e-2, rtol=2e-2), \
        f"max diff {jnp.max(jnp.abs(out - ref))}"

    print("KERNEL_OK")
</pallas_src>

<mosaic_0001>
module attributes {stable_mosaic.version = 11 : i64} {
  func.func @_matmul_kernel(%arg0: i32, %arg1: i32, %arg2: i32, %arg3: memref<16x256xbf16, #tpu.memory_space<vmem>>, %arg4: memref<256x256xbf16, #tpu.memory_space<vmem>>, %arg5: memref<16x256xbf16, #tpu.memory_space<vmem>>, %arg6: memref<16x256xf32, #tpu.memory_space<vmem>>) attributes {dimension_semantics = [#tpu.dimension_semantics<parallel>, #tpu.dimension_semantics<parallel>, #tpu.dimension_semantics<arbitrary>], iteration_bounds = array<i64: 1, 2, 1>, scalar_prefetch = 0 : i64, scratch_operands = 1 : i64, tpu.core_type = #tpu.core_type<tc>, window_params = [{transform_indices = @transform_0, window_bounds = array<i64: 16, 256>}, {transform_indices = @transform_1, window_bounds = array<i64: 256, 256>}, {transform_indices = @transform_2, window_bounds = array<i64: 16, 256>}]} {
    %c0_i32 = arith.constant 0 : i32
    %0 = arith.cmpi eq, %arg2, %c0_i32 : i32
    %1 = arith.extui %0 : i1 to i32
    %c0_i32_0 = arith.constant 0 : i32
    %2 = arith.cmpi ne, %1, %c0_i32_0 : i32
    scf.if %2 {
      %cst_10 = arith.constant 0.000000e+00 : f32
      %12 = vector.broadcast %cst_10 : f32 to vector<16x256xf32>
      %c0_11 = arith.constant 0 : index
      %c0_12 = arith.constant 0 : index
      %13 = vector.load %arg6[%c0_11, %c0_12] : memref<16x256xf32, #tpu.memory_space<vmem>>, vector<16x256xf32>
      tpu.vector_store %arg6[%c0_11, %c0_12], %12 {strides = array<i32>} : memref<16x256xf32, #tpu.memory_space<vmem>>, vector<16x256xf32>,
    } else {
    }
    %c0 = arith.constant 0 : index
    %c0_1 = arith.constant 0 : index
    %3 = vector.load %arg6[%c0, %c0_1] : memref<16x256xf32, #tpu.memory_space<vmem>>, vector<16x256xf32>
    %c0_2 = arith.constant 0 : index
    %c0_3 = arith.constant 0 : index
    %4 = vector.load %arg3[%c0_2, %c0_3] : memref<16x256xbf16, #tpu.memory_space<vmem>>, vector<16x256xbf16>
    %c0_4 = arith.constant 0 : index
    %c0_5 = arith.constant 0 : index
    %5 = vector.load %arg4[%c0_4, %c0_5] : memref<256x256xbf16, #tpu.memory_space<vmem>>, vector<256x256xbf16>
    %cst = arith.constant dense<0.000000e+00> : vector<16x256xf32>
    %6 = tpu.matmul %4, %5, %cst {dimension_numbers = #tpu.dot_dimension_numbers<[1], [0], [0], [1], [0, 0, 1, 1], [], []>} : vector<16x256xbf16>, vector<256x256xbf16>, vector<16x256xf32> -> vector<16x256xf32>
    %7 = arith.addf %3, %6 : vector<16x256xf32>
    %c0_6 = arith.constant 0 : index
    %c0_7 = arith.constant 0 : index
    %8 = vector.load %arg6[%c0_6, %c0_7] : memref<16x256xf32, #tpu.memory_space<vmem>>, vector<16x256xf32>
    tpu.vector_store %arg6[%c0_6, %c0_7], %7 {strides = array<i32>} : memref<16x256xf32, #tpu.memory_space<vmem>>, vector<16x256xf32>,
    %c0_i32_8 = arith.constant 0 : i32
    %9 = arith.cmpi eq, %arg2, %c0_i32_8 : i32
    %10 = arith.extui %9 : i1 to i32
    %c0_i32_9 = arith.constant 0 : i32
    %11 = arith.cmpi ne, %10, %c0_i32_9 : i32
    scf.if %11 {
      %c0_10 = arith.constant 0 : index
      %c0_11 = arith.constant 0 : index
      %12 = vector.load %arg6[%c0_10, %c0_11] : memref<16x256xf32, #tpu.memory_space<vmem>>, vector<16x256xf32>
      %13 = arith.truncf %12 : vector<16x256xf32> to vector<16x256xbf16>
      %c0_12 = arith.constant 0 : index
      %c0_13 = arith.constant 0 : index
      %14 = vector.load %arg5[%c0_12, %c0_13] : memref<16x256xbf16, #tpu.memory_space<vmem>>, vector<16x256xbf16>
      tpu.vector_store %arg5[%c0_12, %c0_13], %13 {strides = array<i32>} : memref<16x256xbf16, #tpu.memory_space<vmem>>, vector<16x256xbf16>,
    } else {
    }
    return
  }
  func.func @transform_0(%arg0: i32, %arg1: i32, %arg2: i32) -> (i32, i32) {
    %c0_i32 = arith.constant 0 : i32
    return %arg0, %arg2 : i32, i32
  }
  func.func @transform_1(%arg0: i32, %arg1: i32, %arg2: i32) -> (i32, i32) {
    %c0_i32 = arith.constant 0 : i32
    return %arg2, %arg1 : i32, i32
  }
  func.func @transform_2(%arg0: i32, %arg1: i32, %arg2: i32) -> (i32, i32) {
    %c0_i32 = arith.constant 0 : i32
    return %arg0, %arg1 : i32, i32
  }
}

</mosaic_0001>

<llo_original>
// kernel: tpu_custom_call.1
$region0: #{tpu_custom_call.1}
  #allocation0 [shape = 'u32[]', space=smem, size = 0x4, offset = 0x4, fixed_abs, tag = 'smem constant byte address 0x4 - core index']
  #allocation1 [shape = 'u32[144,128]{1,0:T(1,128)}', space=vmem, size = 0x12000, scoped, tag = 'internal scratch']
  #allocation2 [shape = 'f32[16,256]{1,0:T(8,128)}', space=vmem, size = 0x4000, scoped, tag = 'scratch operand']
  %s0 = inlined_call_operand.hbm [shape: bf16[16,256], index: 0, kind: input, shape index: {}]
  %s1 = inlined_call_operand.hbm [shape: bf16[256,512], index: 1, kind: input, shape index: {}]
  %s2 = inlined_call_operand.hbm [shape: bf16[16,512], index: 2, kind: output, shape index: {}]
  %s3 = sld [smem:[#allocation0]]
  $region57: #{tpu_custom_call.1} parent=0
    _
  %s5 = ssub.s32 1, %s3
  %s6 = scalar_select 0, %s5, %s3
  $region1: #{tpu_custom_call.1} parent=0
    #allocation3 [shape = 'u8[8192]{0}', space=vmem, size = 0x2000, scoped, tag = 'input window, operand 0, single buffered']
    #allocation4 [shape = 's32[2]{0}', space=sflag, size = 0x8, scoped, tag = 'scoped memory for tpu_custom_call.1']
    #allocation5 [shape = 's32[2]{0}', space=sflag, size = 0x8, scoped, tag = 'scoped memory for tpu_custom_call.1']
    #allocation6 [shape = 'u8[262144]{0}', space=vmem, size = 0x40000, scoped, tag = 'input window, operand 1']
    #allocation7 [shape = 's32[2]{0}', space=sflag, size = 0x8, scoped, tag = 'scoped memory for tpu_custom_call.1']
    #allocation8 [shape = 'u8[16384]{0}', space=vmem, size = 0x4000, scoped, tag = 'output window, operand 0']
    %7 = vsyncpa [#allocation4], 0
    %8 = vsyncpa [#allocation7], 0
    %s9 = scalar_lea.sflag [#allocation7], 1
    %10 = vsyncpa %s9, 0
    %11 = vsyncpa [#allocation5], 0
    %s12 = scalar_lea.sflag [#allocation5], 1
    %13 = vsyncpa %s12, 0
    loop: start=0, step=1, limit=4
    $region2: #{tpu_custom_call.1} parent=1 // loop_pre_header
      _
    $region3: #{tpu_custom_call.1} parent=1 // loop_header
      %s15 = sphi 0, %s19
      %p16 = scmp.ge.s32.totalorder %s15, 4
      %s22 = sphi 0, %s41
      %s23 = sphi 0, %s37
      %s24 = sphi 0, %s33
      %s25 = sphi 0, %s22
      %s26 = sphi 0, %s23
      %s27 = sphi 0, %s24
      %s28 = sphi 0, %s25
      %s29 = sphi 0, %s26
      %s30 = sphi 0, %s27
      %s46 = sphi 0, %s48
      %s49 = sphi 0, %s46
      %s50 = sphi 0, %s49
      %s66 = sphi 0, %s50
      %s74 = sphi 0, %s76
      %s77 = sphi 0, %s74
      %s78 = sphi 0, %s77
      %s94 = sphi 0, %s78
      %s102 = sphi 0, %s104
      %s105 = sphi 0, %s102
      %s106 = sphi 0, %s105
      %s122 = sphi 0, %s106
    $region4: #{tpu_custom_call.1} parent=1 // loop_header_branch
      %18 = sbr.rel (%p16) target = $region8
    $region5: #{tpu_custom_call.1} parent=1 // loop_body
      %s20 = ssub.s32 %s15, 1
      %s21 = ssub.s32 %s15, 2
      %s31 = sadd.s32 1, %s24
      %p32 = scmp.ge.s32.totalorder %s31, 1
      %s33 = scalar_select %p32, 0, %s31
      %s34 = sadd.s32 1, %s23
      %s35 = scalar_select %p32, %s34, %s23
      %p36 = scmp.ge.s32.totalorder %s35, 2
      %s37 = scalar_select %p36, 0, %s35
      %s38 = sadd.s32 1, %s22
      %s39 = scalar_select %p36, %s38, %s22
      %p40 = scmp.ge.s32.totalorder %s39, 1
      %s41 = scalar_select %p40, 0, %s39
      %s42 = ssub.s32 %s22, %s41
      %s43 = ssub.s32 %s24, %s33
      %s44 = sor.u32 %s42, %s43
      %p45 = scmp.eq.s32.totalorder %s44, 0
      %s47 = sadd.s32 %s46, 1
      %s48 = scalar_select %p45, %s46, %s47
      %p51 = pneg %p45
      %p52 = scmp.eq.s32.totalorder %s15, 1
      %p53 = por %p51, %p52
      %p54 = scmp.ne.s32.totalorder %s46, %s49
      %p55 = scmp.eq.s32.totalorder %s15, 0
      %p56 = por %p54, %p55
      %p57 = scmp.ne.s32.totalorder %s46, %s49
      %p58 = scmp.eq.s32.totalorder %s20, 1
      %p59 = por %p57, %p58
      %p60 = scmp.ne.s32.totalorder %s49, %s50
      %p61 = scmp.eq.s32.totalorder %s20, 0
      %p62 = por %p60, %p61
      %p63 = scmp.ne.s32.totalorder %s49, %s50
      %p64 = scmp.eq.s32.totalorder %s21, 1
      %p65 = por %p63, %p64
      %p67 = scmp.ne.s32.totalorder %s50, %s66
      %p68 = scmp.eq.s32.totalorder %s21, 0
      %p69 = por %p67, %p68
      %s70 = ssub.s32 %s24, %s33
      %s71 = ssub.s32 %s23, %s37
      %s72 = sor.u32 %s70, %s71
      %p73 = scmp.eq.s32.totalorder %s72, 0
      %s75 = sadd.s32 %s74, 1
      %s76 = scalar_select %p73, %s74, %s75
      %p79 = pneg %p73
      %p80 = scmp.eq.s32.totalorder %s15, 1
      %p81 = por %p79, %p80
      %p82 = scmp.ne.s32.totalorder %s74, %s77
      %p83 = scmp.eq.s32.totalorder %s15, 0
      %p84 = por %p82, %p83
      %p85 = scmp.ne.s32.totalorder %s74, %s77
      %p86 = scmp.eq.s32.totalorder %s20, 1
      %p87 = por %p85, %p86
      %p88 = scmp.ne.s32.totalorder %s77, %s78
      %p89 = scmp.eq.s32.totalorder %s20, 0
      %p90 = por %p88, %p89
      %p91 = scmp.ne.s32.totalorder %s77, %s78
      %p92 = scmp.eq.s32.totalorder %s21, 1
      %p93 = por %p91, %p92
      %p95 = scmp.ne.s32.totalorder %s78, %s94
      %p96 = scmp.eq.s32.totalorder %s21, 0
      %p97 = por %p95, %p96
      %s98 = ssub.s32 %s22, %s41
      %s99 = ssub.s32 %s23, %s37
      %s100 = sor.u32 %s98, %s99
      %p101 = scmp.eq.s32.totalorder %s100, 0
      %s103 = sadd.s32 %s102, 1
      %s104 = scalar_select %p101, %s102, %s103
      %p107 = pneg %p101
      %p108 = scmp.eq.s32.totalorder %s15, 1
      %p109 = por %p107, %p108
      %p110 = scmp.ne.s32.totalorder %s102, %s105
      %p111 = scmp.eq.s32.totalorder %s15, 0
      %p112 = por %p110, %p111
      %p113 = scmp.ne.s32.totalorder %s102, %s105
      %p114 = scmp.eq.s32.totalorder %s20, 1
      %p115 = por %p113, %p114
      %p116 = scmp.ne.s32.totalorder %s105, %s106
      %p117 = scmp.eq.s32.totalorder %s20, 0
      %p118 = por %p116, %p117
      %p119 = scmp.ne.s32.totalorder %s105, %s106
      %p120 = scmp.eq.s32.totalorder %s21, 1
      %p121 = por %p119, %p120
      %p123 = scmp.ne.s32.totalorder %s106, %s122
      %p124 = scmp.eq.s32.totalorder %s21, 0
      %p125 = por %p123, %p124
      %p126 = scmp.le.s32.totalorder 1, %s15
      %p127 = scmp.lt.s32.totalorder %s15, 3
      %p128 = pnand %p126, %p127
      %p129 = pneg %p128
      // Predicated region
      $region9: #{tpu_custom_call.1} parent=5 // pred_check
        _
      $region10: #{tpu_custom_call.1} parent=5 // pred_check_branch
        %131 = sbr.rel (%p128) target = $region12
      $region11: #{tpu_custom_call.1} parent=5 // pred_region
        %s132 = ssub.s32 %s15, 1
        // Predicated region
        $region13: #{tpu_custom_call.1} parent=11 // pred_check
          %p133 = pneg %p62
        $region14: #{tpu_custom_call.1} parent=11 // pred_check_branch
          %135 = sbr.rel (%p133) target = $region16
        $region15: #{tpu_custom_call.1} parent=11 // pred_region
          %s136 = smul.u32 2, %s25
          %s137 = smul.u32 2, %s27
          %s139 = ssub.s32 256, 256
          %140 = vsyncadd [#allocation4], %s139
          %s141 = smul.addr %s136, 2
          %s142 = sadd.s32 %s137, %s141
          %s143 = smul.addr %s142, 64
          %s144 = scalar_lea.hbm %s0, %s143
          %s145 = sshll.u32 [#allocation3], 4
          %s146 = int_to_ptr.vmem [resolvable:$true] %s145
          %151 = dma.hbm_to_vmem [thread:$0]  %s144, 256, %s146, [#allocation4], 128, 128, 8
        $region16: #{tpu_custom_call.1} parent=11 // pred_fallthru
          _
      $region12: #{tpu_custom_call.1} parent=5 // pred_fallthru
        _
      %p152 = scmp.lt.s32.totalorder %s15, 2
      // Predicated region
      $region17: #{tpu_custom_call.1} parent=5 // pred_check
        %p153 = pneg %p152
      $region18: #{tpu_custom_call.1} parent=5 // pred_check_branch
        %155 = sbr.rel (%p153) target = $region20
      $region19: #{tpu_custom_call.1} parent=5 // pred_region
        // Predicated region
        $region21: #{tpu_custom_call.1} parent=19 // pred_check
          %p156 = pneg %p84
        $region22: #{tpu_custom_call.1} parent=19 // pred_check_branch
          %158 = sbr.rel (%p156) target = $region24
        $region23: #{tpu_custom_call.1} parent=19 // pred_region
          %s159 = sand.u32 %s74, 1
          %s160 = scalar_lea.sflag [#allocation7], %s159
          %s161 = sand.u32 %s74, 1
          %s162 = smul.addr %s161, 256
          %s163 = scalar_lea.vmem [#allocation6], %s162
          %s164 = smul.u32 32, %s24
          %s165 = smul.u32 2, %s23
          %s167 = ssub.s32 4096, 4096
          %168 = vsyncadd %s160, %s167
          %s169 = smul.addr %s164, 4
          %s170 = sadd.s32 %s165, %s169
          %s171 = smul.addr %s170, 64
          %s172 = scalar_lea.hbm %s1, %s171
          %s173 = sshll.u32 %s163, 4
          %s174 = int_to_ptr.vmem [resolvable:$true] %s173
          %179 = dma.hbm_to_vmem [thread:$0]  %s172, 4096, %s174, %s160, 256, 128, 8
        $region24: #{tpu_custom_call.1} parent=19 // pred_fallthru
          _
      $region20: #{tpu_custom_call.1} parent=5 // pred_fallthru
        _
      %p180 = scmp.le.s32.totalorder 1, %s15
      %p181 = scmp.lt.s32.totalorder %s15, 3
      %p182 = pnand %p180, %p181
      %p183 = pneg %p182
      // Predicated region
      $region25: #{tpu_custom_call.1} parent=5 // pred_check
        _
      $region26: #{tpu_custom_call.1} parent=5 // pred_check_branch
        %185 = sbr.rel (%p182) target = $region28
      $region27: #{tpu_custom_call.1} parent=5 // pred_region
        %s186 = ssub.s32 %s15, 1
        // Predicated region
        $region29: #{tpu_custom_call.1} parent=27 // pred_check
          %p187 = pneg %p62
        $region30: #{tpu_custom_call.1} parent=27 // pred_check_branch
          %189 = sbr.rel (%p187) target = $region32
        $region31: #{tpu_custom_call.1} parent=27 // pred_region
          %190 = dma.done [#allocation4], 256
        $region32: #{tpu_custom_call.1} parent=27 // pred_fallthru
          _
        %s191 = sand.u32 %s77, 1
        %s192 = scalar_lea.sflag [#allocation7], %s191
        %s193 = sand.u32 %s77, 1
        %s194 = smul.addr %s193, 256
        %s195 = scalar_lea.vmem [#allocation6], %s194
        // Predicated region
        $region33: #{tpu_custom_call.1} parent=27 // pred_check
          %p196 = pneg %p90
        $region34: #{tpu_custom_call.1} parent=27 // pred_check_branch
          %198 = sbr.rel (%p196) target = $region36
        $region35: #{tpu_custom_call.1} parent=27 // pred_region
          %199 = dma.done %s192, 4096
        $region36: #{tpu_custom_call.1} parent=27 // pred_fallthru
          _
        %p200 = pneg %p62
        %p201 = pneg %p59
        %s202 = sand.u32 %s77, 1
        %s203 = scalar_lea.sflag [#allocation7], %s202
        %s204 = sand.u32 %s77, 1
        %s205 = smul.addr %s204, 256
        %s206 = scalar_lea.vmem [#allocation6], %s205
        %p207 = pneg %p90
        %p208 = pneg %p87
        %p209 = pneg %p118
        %p210 = pneg %p115
        %s211 = sand.u32 %s105, 1
        %s212 = scalar_lea.sflag [#allocation5], %s211
        %s213 = sand.u32 %s105, 1
        %s214 = smul.addr %s213, 16
        %s215 = scalar_lea.vmem [#allocation8], %s214
        %s216 = smul.u32 2, %s25
        %s217 = smul.u32 2, %s27
        %s218 = smul.u32 32, %s27
        %s219 = smul.u32 2, %s26
        %s220 = smul.u32 2, %s25
        %s221 = smul.u32 2, %s26
        %p222 = scmp.eq.s32.totalorder %s27, 0
        // Predicated region
        $region37: #{tpu_custom_call.1} parent=27 // pred_check
          %p223 = pneg %p222
        $region38: #{tpu_custom_call.1} parent=27 // pred_check_branch
          %225 = sbr.rel (%p223) target = $region40
        $region39: #{tpu_custom_call.1} parent=27 // pred_region
          %226 = vst [vmem:[#allocation2] sm:$0xff] 0.0
          %227 = vst [vmem:[#allocation2 + $0x8] sm:$0xff] 0.0
          %228 = vst [vmem:[#allocation2 + $0x10] sm:$0xff] 0.0
          %229 = vst [vmem:[#allocation2 + $0x18] sm:$0xff] 0.0
        $region40: #{tpu_custom_call.1} parent=27 // pred_fallthru
          _
        %v230 = vld [vmem:[#allocation2] sm:$0xff]
        %v231 = vld [vmem:[#allocation2 + $0x8] sm:$0xff]
        %v232 = vld [vmem:[#allocation2 + $0x10] sm:$0xff]
        %v233 = vld [vmem:[#allocation2 + $0x18] sm:$0xff]
        %v234 = vld [vmem:[#allocation3] sm:$0xff]
        %v235 = vld [vmem:[#allocation3 + $0x8] sm:$0xff]
        %v236 = vld [vmem:[%s195] sm:$0xff]
        %v237 = vld [vmem:[%s195 + $0x8] sm:$0xff]
        %v238 = vld [vmem:[%s195 + $0x10] sm:$0xff]
        %v239 = vld [vmem:[%s195 + $0x18] sm:$0xff]
        %v240 = vld [vmem:[%s195 + $0x20] sm:$0xff]
        %v241 = vld [vmem:[%s195 + $0x28] sm:$0xff]
        %v242 = vld [vmem:[%s195 + $0x30] sm:$0xff]
        %v243 = vld [vmem:[%s195 + $0x38] sm:$0xff]
        %v244 = vld [vmem:[%s195 + $0x40] sm:$0xff]
        %v245 = vld [vmem:[%s195 + $0x48] sm:$0xff]
        %v246 = vld [vmem:[%s195 + $0x50] sm:$0xff]
        %v247 = vld [vmem:[%s195 + $0x58] sm:$0xff]
        %v248 = vld [vmem:[%s195 + $0x60] sm:$0xff]
        %v249 = vld [vmem:[%s195 + $0x68] sm:$0xff]
        %v250 = vld [vmem:[%s195 + $0x70] sm:$0xff]
        %v251 = vld [vmem:[%s195 + $0x78] sm:$0xff]
        %v252 = vld [vmem:[%s195 + $0x80] sm:$0xff]
        %v253 = vld [vmem:[%s195 + $0x88] sm:$0xff]
        %v254 = vld [vmem:[%s195 + $0x90] sm:$0xff]
        %v255 = vld [vmem:[%s195 + $0x98] sm:$0xff]
        %v256 = vld [vmem:[%s195 + $0xa0] sm:$0xff]
        %v257 = vld [vmem:[%s195 + $0xa8] sm:$0xff]
        %v258 = vld [vmem:[%s195 + $0xb0] sm:$0xff]
        %v259 = vld [vmem:[%s195 + $0xb8] sm:$0xff]
        %v260 = vld [vmem:[%s195 + $0xc0] sm:$0xff]
        %v261 = vld [vmem:[%s195 + $0xc8] sm:$0xff]
        %v262 = vld [vmem:[%s195 + $0xd0] sm:$0xff]
        %v263 = vld [vmem:[%s195 + $0xd8] sm:$0xff]
        %v264 = vld [vmem:[%s195 + $0xe0] sm:$0xff]
        %v265 = vld [vmem:[%s195 + $0xe8] sm:$0xff]
        %v266 = vld [vmem:[%s195 + $0xf0] sm:$0xff]
        %v267 = vld [vmem:[%s195 + $0xf8] sm:$0xff]
        %v270 = vunpack.c.l.b16 %v234
        %v271 = vunpack.c.h.b16 %v234
        %v272 = vunpack.c.l.b16 %v235
        %v273 = vunpack.c.h.b16 %v235
        %v274 = vpack.c.b16 %v272, %v270
        %v275 = vpack.c.b16 %v273, %v271
        %v310 = vunpack.c.l.b16 %v236
        %v311 = vunpack.c.h.b16 %v236
        %v312 = vunpack.c.l.b16 %v237
        %v313 = vunpack.c.h.b16 %v237
        %v314 = vunpack.c.l.b16 %v238
        %v315 = vunpack.c.h.b16 %v238
        %v316 = vunpack.c.l.b16 %v239
        %v317 = vunpack.c.h.b16 %v239
        %v318 = vunpack.c.l.b16 %v240
        %v319 = vunpack.c.h.b16 %v240
        %v320 = vunpack.c.l.b16 %v241
        %v321 = vunpack.c.h.b16 %v241
        %v322 = vunpack.c.l.b16 %v242
        %v323 = vunpack.c.h.b16 %v242
        %v324 = vunpack.c.l.b16 %v243
        %v325 = vunpack.c.h.b16 %v243
        %v326 = vunpack.c.l.b16 %v244
        %v327 = vunpack.c.h.b16 %v244
        %v328 = vunpack.c.l.b16 %v245
        %v329 = vunpack.c.h.b16 %v245
        %v330 = vunpack.c.l.b16 %v246
        %v331 = vunpack.c.h.b16 %v246
        %v332 = vunpack.c.l.b16 %v247
        %v333 = vunpack.c.h.b16 %v247
        %v334 = vunpack.c.l.b16 %v248
        %v335 = vunpack.c.h.b16 %v248
        %v336 = vunpack.c.l.b16 %v249
        %v337 = vunpack.c.h.b16 %v249
        %v338 = vunpack.c.l.b16 %v250
        %v339 = vunpack.c.h.b16 %v250
        %v340 = vunpack.c.l.b16 %v251
        %v341 = vunpack.c.h.b16 %v251
        %v342 = vunpack.c.l.b16 %v252
        %v343 = vunpack.c.h.b16 %v252
        %v344 = vunpack.c.l.b16 %v253
        %v345 = vunpack.c.h.b16 %v253
        %v346 = vunpack.c.l.b16 %v254
        %v347 = vunpack.c.h.b16 %v254
        %v348 = vunpack.c.l.b16 %v255
        %v349 = vunpack.c.h.b16 %v255
        %v350 = vunpack.c.l.b16 %v256
        %v351 = vunpack.c.h.b16 %v256
        %v352 = vunpack.c.l.b16 %v257
        %v353 = vunpack.c.h.b16 %v257
        %v354 = vunpack.c.l.b16 %v258
        %v355 = vunpack.c.h.b16 %v258
        %v356 = vunpack.c.l.b16 %v259
        %v357 = vunpack.c.h.b16 %v259
        %v358 = vunpack.c.l.b16 %v260
        %v359 = vunpack.c.h.b16 %v260
        %v360 = vunpack.c.l.b16 %v261
        %v361 = vunpack.c.h.b16 %v261
        %v362 = vunpack.c.l.b16 %v262
        %v363 = vunpack.c.h.b16 %v262
        %v364 = vunpack.c.l.b16 %v263
        %v365 = vunpack.c.h.b16 %v263
        %v366 = vunpack.c.l.b16 %v264
        %v367 = vunpack.c.h.b16 %v264
        %v368 = vunpack.c.l.b16 %v265
        %v369 = vunpack.c.h.b16 %v265
        %v370 = vunpack.c.l.b16 %v266
        %v371 = vunpack.c.h.b16 %v266
        %v372 = vunpack.c.l.b16 %v267
        %v373 = vunpack.c.h.b16 %v267
        %v374 = vpack.c.b16 %v312, %v310
        %v375 = vpack.c.b16 %v313, %v311
        %v376 = vpack.c.b16 %v316, %v314
        %v377 = vpack.c.b16 %v317, %v315
        %v378 = vpack.c.b16 %v320, %v318
        %v379 = vpack.c.b16 %v321, %v319
        %v380 = vpack.c.b16 %v324, %v322
        %v381 = vpack.c.b16 %v325, %v323
        %v382 = vpack.c.b16 %v328, %v326
        %v383 = vpack.c.b16 %v329, %v327
        %v384 = vpack.c.b16 %v332, %v330
        %v385 = vpack.c.b16 %v333, %v331
        %v386 = vpack.c.b16 %v336, %v334
        %v387 = vpack.c.b16 %v337, %v335
        %v388 = vpack.c.b16 %v340, %v338
        %v389 = vpack.c.b16 %v341, %v339
        %v390 = vpack.c.b16 %v344, %v342
        %v391 = vpack.c.b16 %v345, %v343
        %v392 = vpack.c.b16 %v348, %v346
        %v393 = vpack.c.b16 %v349, %v347
        %v394 = vpack.c.b16 %v352, %v350
        %v395 = vpack.c.b16 %v353, %v351
        %v396 = vpack.c.b16 %v356, %v354
        %v397 = vpack.c.b16 %v357, %v355
        %v398 = vpack.c.b16 %v360, %v358
        %v399 = vpack.c.b16 %v361, %v359
        %v400 = vpack.c.b16 %v364, %v362
        %v401 = vpack.c.b16 %v365, %v363
        %v402 = vpack.c.b16 %v368, %v366
        %v403 = vpack.c.b16 %v369, %v367
        %v404 = vpack.c.b16 %v372, %v370
        %v405 = vpack.c.b16 %v373, %v371
        %438 = vmatprep.subr.bf16.mxu0 %v375
        %439 = vmatpush1.bf16.msra.mxu0 %v374
        %440 = vmatprep.subr.bf16.mxu0 %v377
        %441 = vmatpush1.bf16.msra.mxu0 %v376
        %442 = vmatprep.subr.bf16.mxu0 %v379
        %443 = vmatpush1.bf16.msra.mxu0 %v378
        %444 = vmatprep.subr.bf16.mxu0 %v381
        %445 = vmatpush1.bf16.msra.mxu0 %v380
        %446 = vmatprep.subr.bf16.mxu0 %v383
        %447 = vmatpush1.bf16.msra.mxu0 %v382
        %448 = vmatprep.subr.bf16.mxu0 %v385
        %449 = vmatpush1.bf16.msra.mxu0 %v384
        %450 = vmatprep.subr.bf16.mxu0 %v387
        %451 = vmatpush1.bf16.msra.mxu0 %v386
        %452 = vmatprep.subr.bf16.mxu0 %v389
        %453 = vmatpush1.bf16.msra.mxu0 %v388
        %454 = vmatprep.subr.bf16.mxu0 %v391
        %455 = vmatpush1.bf16.msra.mxu0 %v390
        %456 = vmatprep.subr.bf16.mxu0 %v393
        %457 = vmatpush1.bf16.msra.mxu0 %v392
        %458 = vmatprep.subr.bf16.mxu0 %v395
        %459 = vmatpush1.bf16.msra.mxu0 %v394
        %460 = vmatprep.subr.bf16.mxu0 %v397
        %461 = vmatpush1.bf16.msra.mxu0 %v396
        %462 = vmatprep.subr.bf16.mxu0 %v399
        %463 = vmatpush1.bf16.msra.mxu0 %v398
        %464 = vmatprep.subr.bf16.mxu0 %v401
        %465 = vmatpush1.bf16.msra.mxu0 %v400
        %466 = vmatprep.subr.bf16.mxu0 %v403
        %467 = vmatpush1.bf16.msra.mxu0 %v402
        %468 = vmatprep.subr.bf16.mxu0 %v405
        %469 = vmatpush1.bf16.msra.mxu0 %v404
        %470 = vmatprep.mubr.bf16.mxu0 %v275
        %471 = vmatmul.mubr.bf16.gmra.mrb[0].mxu0 %v274
        %v472 = vpop.f32.mrb[0].mxu0
        %v473 = vadd.f32 0.0, %v472
        %v474 = vpop.f32.mrb[0].mxu0
        %v475 = vadd.f32 0.0, %v474
        %v476 = vpop.f32.mrb[0].mxu0
        %v477 = vadd.f32 0.0, %v476
        %v478 = vpop.f32.mrb[0].mxu0
        %v479 = vadd.f32 0.0, %v478
        %480 = vdwg.mxu0
        %v481 = vadd.f32 %v230, %v473
        %v482 = vadd.f32 %v231, %v475
        %v483 = vadd.f32 %v232, %v477
        %v484 = vadd.f32 %v233, %v479
        %485 = vst [vmem:[#allocation2] sm:$0xff] %v481
        %486 = vst [vmem:[#allocation2 + $0x8] sm:$0xff] %v482
        %487 = vst [vmem:[#allocation2 + $0x10] sm:$0xff] %v483
        %488 = vst [vmem:[#allocation2 + $0x18] sm:$0xff] %v484
        // Predicated region
        $region41: #{tpu_custom_call.1} parent=27 // pred_check
          %p489 = pneg %p222
        $region42: #{tpu_custom_call.1} parent=27 // pred_check_branch
          %491 = sbr.rel (%p489) target = $region44
        $region43: #{tpu_custom_call.1} parent=27 // pred_region
          %v492 = vld [vmem:[#allocation2] sm:$0xff]
          %v493 = vld [vmem:[#allocation2 + $0x8] sm:$0xff]
          %v494 = vld [vmem:[#allocation2 + $0x10] sm:$0xff]
          %v495 = vld [vmem:[#allocation2 + $0x18] sm:$0xff]
          %v496 = vpack.c.bf16 %v494, %v492
          %v497 = vpack.c.bf16 %v495, %v493
          %v500 = vunpack.c.l.b16 %v496
          %v501 = vunpack.c.l.b16 %v497
          %v502 = vunpack.c.h.b16 %v496
          %v503 = vunpack.c.h.b16 %v497
          %v504 = vpack.c.b16 %v501, %v500
          %v505 = vpack.c.b16 %v503, %v502
          %508 = vst [vmem:[%s215] sm:$0xff] %v504
          %509 = vst [vmem:[%s215 + $0x8] sm:$0xff] %v505
        $region44: #{tpu_custom_call.1} parent=27 // pred_fallthru
          _
        %s510 = sand.u32 %s105, 1
        %s511 = scalar_lea.sflag [#allocation5], %s510
        %s512 = sand.u32 %s105, 1
        %s513 = smul.addr %s512, 16
        %s514 = scalar_lea.vmem [#allocation8], %s513
        // Predicated region
        $region45: #{tpu_custom_call.1} parent=27 // pred_check
          %p515 = pneg %p115
        $region46: #{tpu_custom_call.1} parent=27 // pred_check_branch
          %517 = sbr.rel (%p515) target = $region48
        $region47: #{tpu_custom_call.1} parent=27 // pred_region
          %s518 = smul.u32 2, %s25
          %s519 = smul.u32 2, %s26
          %s521 = ssub.s32 256, 256
          %522 = vsyncadd %s511, %s521
          %s523 = smul.addr %s518, 4
          %s524 = sadd.s32 %s519, %s523
          %s525 = smul.addr %s524, 64
          %s526 = scalar_lea.hbm %s2, %s525
          %s527 = sshll.u32 %s514, 4
          %s528 = int_to_ptr.vmem [resolvable:$true] %s527
          %533 = dma.vmem_to_hbm [thread:$0]  %s528, 256, %s526, %s511, 128, 256, 8
        $region48: #{tpu_custom_call.1} parent=27 // pred_fallthru
          _
      $region28: #{tpu_custom_call.1} parent=5 // pred_fallthru
        _
      %p534 = scmp.le.s32.totalorder 2, %s15
      // Predicated region
      $region49: #{tpu_custom_call.1} parent=5 // pred_check
        %p535 = pneg %p534
      $region50: #{tpu_custom_call.1} parent=5 // pred_check_branch
        %537 = sbr.rel (%p535) target = $region52
      $region51: #{tpu_custom_call.1} parent=5 // pred_region
        %s538 = ssub.s32 %s15, 2
        // Predicated region
        $region53: #{tpu_custom_call.1} parent=51 // pred_check
          %p539 = pneg %p121
        $region54: #{tpu_custom_call.1} parent=51 // pred_check_branch
          %541 = sbr.rel (%p539) target = $region56
        $region55: #{tpu_custom_call.1} parent=51 // pred_region
          %s542 = sand.u32 %s106, 1
          %s543 = scalar_lea.sflag [#allocation5], %s542
          %s544 = sand.u32 %s106, 1
          %s545 = smul.addr %s544, 16
          %s546 = scalar_lea.vmem [#allocation8], %s545
          %547 = dma.done %s543, 256
        $region56: #{tpu_custom_call.1} parent=51 // pred_fallthru
          _
      $region52: #{tpu_custom_call.1} parent=5 // pred_fallthru
        _
    $region6: #{tpu_custom_call.1} parent=1 // loop_footer
      %s19 = sadd.s32 1, %s15
    $region7: #{tpu_custom_call.1} parent=1 // loop_footer_branch
      %14 = sbr.rel target = $region3
    $region8: #{tpu_custom_call.1} parent=1 // loop_exit
      _
    %548 = vsyncpa [#allocation4], 1
    %s549 = scalar_lea.sflag [#allocation4], 1
    %550 = vsyncpa %s549, 1
    %551 = vsyncpa [#allocation7], 1
    %s552 = scalar_lea.sflag [#allocation7], 1
    %553 = vsyncpa %s552, 1
    %554 = vsyncpa [#allocation5], 1
    %s555 = scalar_lea.sflag [#allocation5], 1
    %556 = vsyncpa %s555, 1

</llo_original>
